<compile_context>
chip_gen: v7x
topology: tpu7x:2x2x1
jax: 0.10.0
libtpu: 0.0.40
codegen_flags: <defaults>
</compile_context>

<pallas_src>
import functools

import jax
import jax.numpy as jnp
from jax.experimental import pallas as pl
from jax.experimental.pallas import tpu as pltpu

VERY_NEGATIVE_NUMBER = -1e30


def _bilinear_attn_kernel(inv_rescale,
                          q_ref, k_ref, v_ref, mask_ref, w_ref,
                          o_ref, kw_ref):
    # Refs (leading size-1 batch dim squeezed away by the BlockSpecs):
    #   q_ref    : (tq, Hq)      k_ref : (Lk, Hk)     v_ref : (Lk, Dv)
    #   mask_ref : (tq, Lk)      w_ref : (Hk, Hq)     o_ref : (tq, Dv)
    #   kw_ref   : (Lk, Hq) VMEM scratch, persists across the qi grid axis.
    qi = pl.program_id(1)

    # ---- Hoisted per-batch work: kW = (k @ W) * (1/rescale) ----------------
    @pl.when(qi == 0)
    def _():
        kw = jax.lax.dot_general(
            k_ref[...], w_ref[...],
            dimension_numbers=(((1,), (0,)), ((), ())),   # contract Hk
            preferred_element_type=jnp.float32)           # (Lk, Hq)
        kw_ref[...] = (kw * jnp.float32(inv_rescale)).astype(kw_ref.dtype)

    # ---- Scores: q_tile @ kW^T via dot_general (no materialized transpose) -
    s = jax.lax.dot_general(
        q_ref[...], kw_ref[...],
        dimension_numbers=(((1,), (1,)), ((), ())),       # contract Hq
        preferred_element_type=jnp.float32)               # (tq, Lk), f32

    # ---- exp_mask + numerically-stable softmax (kept in f32) ---------------
    valid = mask_ref[...] != 0                            # (tq, Lk) bool
    s = jnp.where(valid, s, jnp.float32(VERY_NEGATIVE_NUMBER))
    s_max = jnp.max(s, axis=-1, keepdims=True)            # (tq, 1)
    e = jnp.exp(s - s_max)                                # (tq, Lk)
    denom = jnp.sum(e, axis=-1, keepdims=True)            # (tq, 1), >= 1

    # ---- Un-normalized weighted sum, then normalize (cheaper on Dv cols) ---
    acc = jnp.dot(e.astype(v_ref.dtype), v_ref[...],
                  preferred_element_type=jnp.float32)     # (tq, Dv), f32

    inv = pl.reciprocal(denom, approx=True)               # EUP slot
    inv = inv * (2.0 - denom * inv)                       # 1 Newton step, (tq,1)

    # zero_mask(mask_2d_to_1d(mask)): rows with no valid key -> exact zeros.
    row_mask = jnp.max(valid.astype(jnp.float32), axis=-1, keepdims=True)
    o_ref[...] = (acc * (inv * row_mask)).astype(o_ref.dtype)


def bilinear_attn(q, k, v, attn_mask, weight, *, block_q=None):
    """q:[B,Lq,Hq] k:[B,Lk,Hk] v:[B,Lk,Dv] attn_mask:[B,Lq,Lk] weight:[Hk,Hq]."""
    B, Lq, Hq = q.shape
    _, Lk, Hk = k.shape
    Dv = v.shape[-1]

    if block_q is None:
        block_q = Lq
        for cand in (512, 256, 128, 64, 32, 16, 8):
            if Lq % cand == 0:
                block_q = cand
                break
    assert Lq % block_q == 0, "Lq must be divisible by block_q"
    n_q = Lq // block_q

    # Rescale uses the *logical* sequence lengths, not tile shapes.
    inv_rescale = 1.0 / ((0.5 * (Lq + Lk)) ** 0.5)
    kernel = functools.partial(_bilinear_attn_kernel, inv_rescale)

    return pl.pallas_call(
        kernel,
        out_shape=jax.ShapeDtypeStruct((B, Lq, Dv), q.dtype),
        grid_spec=pltpu.PrefetchScalarGridSpec(
            num_scalar_prefetch=0,
            grid=(B, n_q),
            in_specs=[
                # q / mask / out are tiled over Lq; k / v / w stay resident
                # across the qi axis (index_map ignores qi -> no re-DMA).
                pl.BlockSpec((None, block_q, Hq), lambda b, qi: (b, qi, 0)),
                pl.BlockSpec((None, Lk, Hk),      lambda b, qi: (b, 0, 0)),
                pl.BlockSpec((None, Lk, Dv),      lambda b, qi: (b, 0, 0)),
                pl.BlockSpec((None, block_q, Lk), lambda b, qi: (b, qi, 0)),
                pl.BlockSpec((Hk, Hq),            lambda b, qi: (0, 0)),
            ],
            out_specs=pl.BlockSpec((None, block_q, Dv), lambda b, qi: (b, qi, 0)),
            scratch_shapes=[pltpu.VMEM((Lk, Hq), q.dtype)],   # kW, per-batch
        ),
        compiler_params=pltpu.CompilerParams(
            # B is megacore-parallel; the Lq axis must be "arbitrary" because
            # the kW scratch (computed at qi == 0) is carried across it.
            dimension_semantics=("parallel", "arbitrary")),
    )(q, k, v, attn_mask, weight)


def bilinear_attn_ref(q, k, v, attn_mask, weight):
    # Pure-JAX reference mirroring the PyTorch forward.
    lq, lk = q.shape[-2], k.shape[-2]
    tq = jnp.einsum("bqh,oh->bqo", q, weight)
    s = jnp.einsum("bqo,bko->bqk", tq, k) / ((0.5 * (lq + lk)) ** 0.5)
    s = s + (1.0 - attn_mask) * VERY_NEGATIVE_NUMBER
    p = jax.nn.softmax(s, axis=-1)
    out = jnp.einsum("bqk,bkd->bqd", p, v)
    row_mask = jnp.max(attn_mask, axis=-1, keepdims=True)
    return out * row_mask


if __name__ == "__main__":
    # Small but TPU-friendly demo shapes: lane-dense feature dims (128), and
    # Lq = 2 * block_q so the Lq-tiling + kW-hoist path is exercised.
    B, Lq, Lk, Hq, Hk, Dv = 2, 16, 16, 128, 128, 128

    key = jax.random.PRNGKey(0)
    kq, kk, kv, km, kw = jax.random.split(key, 5)

    q = jax.random.normal(kq, (B, Lq, Hq), dtype=jnp.float32)
    k = jax.random.normal(kk, (B, Lk, Hk), dtype=jnp.float32)
    v = jax.random.normal(kv, (B, Lk, Dv), dtype=jnp.float32)
    # nn.Linear(Hq, Hk, bias=False) weight, shape (Hk, Hq)
    weight = jax.random.normal(kw, (Hk, Hq), dtype=jnp.float32) * (1.0 / (Hq ** 0.5))

    # Float 0/1 attention mask (the kernel only needs `!= 0`, so int8/bool
    # also works and cuts HBM traffic). Last key masked everywhere; batch 1's
    # last query row fully masked to exercise zero_mask.
    mask = (jax.random.uniform(km, (B, Lq, Lk)) < 0.85).astype(jnp.float32)
    mask = mask.at[:, :, -1].set(0.0)
    mask = mask.at[:, :, 0].set(1.0)          # every row has >=1 valid key...
    mask = mask.at[1, -1, :].set(0.0)         # ...except this fully-masked row

    out = bilinear_attn(q, k, v, mask, weight)
    out = jax.block_until_ready(out)

    ref = bilinear_attn_ref(q, k, v, mask, weight)
    assert out.shape == ref.shape
    assert jnp.allclose(out, ref, atol=1e-3, rtol=1e-3), "mismatch vs JAX reference"

    print("KERNEL_OK")
</pallas_src>

<mosaic_0001>
module attributes {stable_mosaic.version = 11 : i64} {
  func.func @_bilinear_attn_kernel(%arg0: i32, %arg1: i32, %arg2: memref<1x16x128xf32, #tpu.memory_space<vmem>>, %arg3: memref<1x16x128xf32, #tpu.memory_space<vmem>>, %arg4: memref<1x16x128xf32, #tpu.memory_space<vmem>>, %arg5: memref<1x16x16xf32, #tpu.memory_space<vmem>>, %arg6: memref<128x128xf32, #tpu.memory_space<vmem>>, %arg7: memref<1x16x128xf32, #tpu.memory_space<vmem>>, %arg8: memref<16x128xf32, #tpu.memory_space<vmem>>) attributes {dimension_semantics = [#tpu.dimension_semantics<parallel>, #tpu.dimension_semantics<arbitrary>], iteration_bounds = array<i64: 2, 1>, scalar_prefetch = 0 : i64, scratch_operands = 1 : i64, tpu.core_type = #tpu.core_type<tc>, window_params = [{transform_indices = @transform_0, window_bounds = array<i64: 1, 16, 128>}, {transform_indices = @transform_1, window_bounds = array<i64: 1, 16, 128>}, {transform_indices = @transform_2, window_bounds = array<i64: 1, 16, 128>}, {transform_indices = @transform_3, window_bounds = array<i64: 1, 16, 16>}, {pipeline_mode = #tpu.pipeline_mode<synchronous>, transform_indices = @transform_4, window_bounds = array<i64: 128, 128>}, {transform_indices = @transform_5, window_bounds = array<i64: 1, 16, 128>}]} {
    %c0_i32 = arith.constant 0 : i32
    %0 = arith.cmpi eq, %arg1, %c0_i32 : i32
    %1 = arith.extui %0 : i1 to i32
    %c0_i32_0 = arith.constant 0 : i32
    %2 = arith.cmpi ne, %1, %c0_i32_0 : i32
    scf.if %2 {
      %c0_21 = arith.constant 0 : index
      %c0_22 = arith.constant 0 : index
      %c0_23 = arith.constant 0 : index
      %38 = vector.load %arg3[%c0_21, %c0_22, %c0_23] : memref<1x16x128xf32, #tpu.memory_space<vmem>>, vector<1x16x128xf32>
      %39 = vector.shape_cast %38 : vector<1x16x128xf32> to vector<16x128xf32>
      %c0_24 = arith.constant 0 : index
      %c0_25 = arith.constant 0 : index
      %40 = vector.load %arg6[%c0_24, %c0_25] : memref<128x128xf32, #tpu.memory_space<vmem>>, vector<128x128xf32>
      %cst_26 = arith.constant dense<0.000000e+00> : vector<16x128xf32>
      %41 = tpu.matmul %39, %40, %cst_26 {dimension_numbers = #tpu.dot_dimension_numbers<[1], [0], [0], [1], [0, 0, 1, 1], [], []>} : vector<16x128xf32>, vector<128x128xf32>, vector<16x128xf32> -> vector<16x128xf32>
      %cst_27 = arith.constant 2.500000e-01 : f32
      %42 = vector.broadcast %cst_27 : f32 to vector<16x128xf32>
      %43 = arith.mulf %41, %42 : vector<16x128xf32>
      %c0_28 = arith.constant 0 : index
      %c0_29 = arith.constant 0 : index
      %44 = vector.load %arg8[%c0_28, %c0_29] : memref<16x128xf32, #tpu.memory_space<vmem>>, vector<16x128xf32>
      tpu.vector_store %arg8[%c0_28, %c0_29], %43 {strides = array<i32>} : memref<16x128xf32, #tpu.memory_space<vmem>>, vector<16x128xf32>,
    } else {
    }
    %c0 = arith.constant 0 : index
    %c0_1 = arith.constant 0 : index
    %c0_2 = arith.constant 0 : index
    %3 = vector.load %arg2[%c0, %c0_1, %c0_2] : memref<1x16x128xf32, #tpu.memory_space<vmem>>, vector<1x16x128xf32>
    %4 = vector.shape_cast %3 : vector<1x16x128xf32> to vector<16x128xf32>
    %c0_3 = arith.constant 0 : index
    %c0_4 = arith.constant 0 : index
    %5 = vector.load %arg8[%c0_3, %c0_4] : memref<16x128xf32, #tpu.memory_space<vmem>>, vector<16x128xf32>
    %cst = arith.constant dense<0.000000e+00> : vector<16x16xf32>
    %6 = tpu.matmul %4, %5, %cst {dimension_numbers = #tpu.dot_dimension_numbers<[1], [1], [0], [0], [0, 0, 1, 0], [], []>} : vector<16x128xf32>, vector<16x128xf32>, vector<16x16xf32> -> vector<16x16xf32>
    %c0_5 = arith.constant 0 : index
    %c0_6 = arith.constant 0 : index
    %c0_7 = arith.constant 0 : index
    %7 = vector.load %arg5[%c0_5, %c0_6, %c0_7] : memref<1x16x16xf32, #tpu.memory_space<vmem>>, vector<1x16x16xf32>
    %8 = vector.shape_cast %7 : vector<1x16x16xf32> to vector<16x16xf32>
    %cst_8 = arith.constant 0.000000e+00 : f32
    %9 = vector.broadcast %cst_8 : f32 to vector<16x16xf32>
    %10 = arith.cmpf one, %8, %9 : vector<16x16xf32>
    %cst_9 = arith.constant -1.000000e+30 : f32
    %11 = vector.broadcast %cst_9 : f32 to vector<16x16xf32>
    %12 = arith.select %10, %6, %11 : vector<16x16xi1>, vector<16x16xf32>
    %cst_10 = arith.constant dense<0xFF800000> : vector<16xf32>
    %13 = vector.multi_reduction <maximumf>, %12, %cst_10 [1] : vector<16x16xf32> to vector<16xf32>
    %14 = vector.shape_cast %13 : vector<16xf32> to vector<16x1xf32>
    %15 = vector.broadcast %14 : vector<16x1xf32> to vector<16x16xf32>
    %16 = arith.subf %12, %15 : vector<16x16xf32>
    %17 = math.exp %16 : vector<16x16xf32>
    %cst_11 = arith.constant dense<0.000000e+00> : vector<16xf32>
    %18 = vector.multi_reduction <add>, %17, %cst_11 [1] : vector<16x16xf32> to vector<16xf32>
    %19 = vector.shape_cast %18 : vector<16xf32> to vector<16x1xf32>
    %c0_12 = arith.constant 0 : index
    %c0_13 = arith.constant 0 : index
    %c0_14 = arith.constant 0 : index
    %20 = vector.load %arg4[%c0_12, %c0_13, %c0_14] : memref<1x16x128xf32, #tpu.memory_space<vmem>>, vector<1x16x128xf32>
    %21 = vector.shape_cast %20 : vector<1x16x128xf32> to vector<16x128xf32>
    %cst_15 = arith.constant dense<0.000000e+00> : vector<16x128xf32>
    %22 = tpu.matmul %17, %21, %cst_15 {dimension_numbers = #tpu.dot_dimension_numbers<[1], [0], [0], [1], [0, 0, 1, 1], [], []>} : vector<16x16xf32>, vector<16x128xf32>, vector<16x128xf32> -> vector<16x128xf32>
    %23 = tpu.reciprocal %19 {approx = true} : vector<16x1xf32> -> vector<16x1xf32>
    %24 = arith.mulf %19, %23 : vector<16x1xf32>
    %cst_16 = arith.constant 2.000000e+00 : f32
    %25 = vector.broadcast %cst_16 : f32 to vector<16x1xf32>
    %26 = arith.subf %25, %24 : vector<16x1xf32>
    %27 = arith.mulf %23, %26 : vector<16x1xf32>
    %28 = arith.extui %10 : vector<16x16xi1> to vector<16x16xi32>
    %29 = arith.sitofp %28 : vector<16x16xi32> to vector<16x16xf32>
    %cst_17 = arith.constant dense<0xFF800000> : vector<16xf32>
    %30 = vector.multi_reduction <maximumf>, %29, %cst_17 [1] : vector<16x16xf32> to vector<16xf32>
    %31 = vector.shape_cast %30 : vector<16xf32> to vector<16x1xf32>
    %32 = arith.mulf %27, %31 : vector<16x1xf32>
    %33 = vector.broadcast %32 : vector<16x1xf32> to vector<16x128xf32>
    %34 = arith.mulf %22, %33 : vector<16x128xf32>
    %c0_18 = arith.constant 0 : index
    %c0_19 = arith.constant 0 : index
    %c0_20 = arith.constant 0 : index
    %35 = vector.load %arg7[%c0_18, %c0_19, %c0_20] : memref<1x16x128xf32, #tpu.memory_space<vmem>>, vector<1x16x128xf32>
    %36 = vector.shape_cast %35 : vector<1x16x128xf32> to vector<16x128xf32>
    %37 = vector.shape_cast %34 : vector<16x128xf32> to vector<1x16x128xf32>
    tpu.vector_store %arg7[%c0_18, %c0_19, %c0_20], %37 {strides = array<i32>} : memref<1x16x128xf32, #tpu.memory_space<vmem>>, vector<1x16x128xf32>,
    return
  }
  func.func @transform_0(%arg0: i32, %arg1: i32) -> (i32, i32, i32) {
    %c0_i32 = arith.constant 0 : i32
    %c0_i32_0 = arith.constant 0 : i32
    return %arg0, %arg1, %c0_i32 : i32, i32, i32
  }
  func.func @transform_1(%arg0: i32, %arg1: i32) -> (i32, i32, i32) {
    %c0_i32 = arith.constant 0 : i32
    %c0_i32_0 = arith.constant 0 : i32
    %c0_i32_1 = arith.constant 0 : i32
    return %arg0, %c0_i32, %c0_i32_0 : i32, i32, i32
  }
  func.func @transform_2(%arg0: i32, %arg1: i32) -> (i32, i32, i32) {
    %c0_i32 = arith.constant 0 : i32
    %c0_i32_0 = arith.constant 0 : i32
    %c0_i32_1 = arith.constant 0 : i32
    return %arg0, %c0_i32, %c0_i32_0 : i32, i32, i32
  }
  func.func @transform_3(%arg0: i32, %arg1: i32) -> (i32, i32, i32) {
    %c0_i32 = arith.constant 0 : i32
    %c0_i32_0 = arith.constant 0 : i32
    return %arg0, %arg1, %c0_i32 : i32, i32, i32
  }
  func.func @transform_4(%arg0: i32, %arg1: i32) -> (i32, i32) {
    %c0_i32 = arith.constant 0 : i32
    %c0_i32_0 = arith.constant 0 : i32
    %c0_i32_1 = arith.constant 0 : i32
    return %c0_i32, %c0_i32_0 : i32, i32
  }
  func.func @transform_5(%arg0: i32, %arg1: i32) -> (i32, i32, i32) {
    %c0_i32 = arith.constant 0 : i32
    %c0_i32_0 = arith.constant 0 : i32
    return %arg0, %arg1, %c0_i32 : i32, i32, i32
  }
}

</mosaic_0001>

<llo_original>
// kernel: tpu_custom_call.1
$region0: #{tpu_custom_call.1}
  #allocation0 [shape = 'u32[]', space=smem, size = 0x4, offset = 0x4, fixed_abs, tag = 'smem constant byte address 0x4 - core index']
  #allocation1 [shape = 'u32[144,128]{1,0:T(1,128)}', space=vmem, size = 0x12000, scoped, tag = 'internal scratch']
  #allocation2 [shape = 'f32[16,128]{1,0:T(8,128)}', space=vmem, size = 0x2000, scoped, tag = 'scratch operand']
  %s0 = inlined_call_operand.hbm [shape: f32[2,16,128], index: 0, kind: input, shape index: {}]
  %s1 = inlined_call_operand.hbm [shape: f32[2,16,128], index: 1, kind: input, shape index: {}]
  %s2 = inlined_call_operand.hbm [shape: f32[2,16,128], index: 2, kind: input, shape index: {}]
  %s3 = inlined_call_operand.hbm [shape: f32[2,16,16], index: 3, kind: input, shape index: {}]
  %s4 = inlined_call_operand.hbm [shape: f32[128,128], index: 4, kind: input, shape index: {}]
  %s5 = inlined_call_operand.hbm [shape: f32[2,16,128], index: 5, kind: output, shape index: {}]
  %s6 = sld [smem:[#allocation0]]
  $region77: #{tpu_custom_call.1} parent=0
    _
  %s8 = ssub.s32 1, %s6
  %s9 = scalar_select 0, %s8, %s6
  $region1: #{tpu_custom_call.1} parent=0
    #allocation3 [shape = 'u8[16384]{0}', space=vmem, size = 0x4000, scoped, tag = 'input window, operand 0']
    #allocation4 [shape = 's32[2]{0}', space=sflag, size = 0x8, scoped, tag = 'scoped memory for tpu_custom_call.1']
    #allocation5 [shape = 's32[2]{0}', space=sflag, size = 0x8, scoped, tag = 'scoped memory for tpu_custom_call.1']
    #allocation6 [shape = 'u8[16384]{0}', space=vmem, size = 0x4000, scoped, tag = 'input window, operand 1']
    #allocation7 [shape = 's32[2]{0}', space=sflag, size = 0x8, scoped, tag = 'scoped memory for tpu_custom_call.1']
    #allocation8 [shape = 'u8[16384]{0}', space=vmem, size = 0x4000, scoped, tag = 'input window, operand 2']
    #allocation9 [shape = 'u8[16384]{0}', space=vmem, size = 0x4000, scoped, tag = 'input window, operand 3']
    #allocation10 [shape = 's32[2]{0}', space=sflag, size = 0x8, scoped, tag = 'scoped memory for tpu_custom_call.1']
    #allocation11 [shape = 'u8[65536]{0}', space=vmem, size = 0x10000, scoped, tag = 'input window, operand 4, single buffered']
    #allocation12 [shape = 'u8[16384]{0}', space=vmem, size = 0x4000, scoped, tag = 'output window, operand 0']
    %10 = vsyncpa [#allocation4], 0
    %s11 = scalar_lea.sflag [#allocation4], 1
    %12 = vsyncpa %s11, 0
    %13 = vsyncpa [#allocation7], 0
    %s14 = scalar_lea.sflag [#allocation7], 1
    %15 = vsyncpa %s14, 0
    %16 = vsyncpa [#allocation10], 0
    %s17 = scalar_lea.sflag [#allocation10], 1
    %18 = vsyncpa %s17, 0
    %19 = vsyncpa [#allocation5], 0
    %s20 = scalar_lea.sflag [#allocation5], 1
    %21 = vsyncpa %s20, 0
    loop: start=0, step=1, limit=4
    $region2: #{tpu_custom_call.1} parent=1 // loop_pre_header
      _
    $region3: #{tpu_custom_call.1} parent=1 // loop_header
      %s23 = sphi 0, %s27
      %p24 = scmp.ge.s32.totalorder %s23, 4
      %s30 = sphi 0, %s42
      %s31 = sphi 0, %s38
      %s32 = sphi 0, %s30
      %s33 = sphi 0, %s31
      %s34 = sphi 0, %s32
      %s35 = sphi 0, %s33
      %s47 = sphi 0, %s49
      %s50 = sphi 0, %s47
      %s51 = sphi 0, %s50
      %s67 = sphi 0, %s51
      %s73 = sphi 0, %s75
      %s76 = sphi 0, %s73
      %s77 = sphi 0, %s76
      %s93 = sphi 0, %s77
      %s99 = sphi 0, %s101
      %s102 = sphi 0, %s99
      %s103 = sphi 0, %s102
      %s119 = sphi 0, %s103
      %s127 = sphi 0, %s129
      %s130 = sphi 0, %s127
      %s131 = sphi 0, %s130
      %s147 = sphi 0, %s131
      %s151 = sphi 0, %s151
      %s153 = sphi 0, %s151
      %s154 = sphi 0, %s153
      %s168 = sphi 0, %s154
      %s176 = sphi 0, %s178
      %s179 = sphi 0, %s176
      %s180 = sphi 0, %s179
      %s196 = sphi 0, %s180
    $region4: #{tpu_custom_call.1} parent=1 // loop_header_branch
      %26 = sbr.rel (%p24) target = $region8
    $region5: #{tpu_custom_call.1} parent=1 // loop_body
      %s28 = ssub.s32 %s23, 1
      %s29 = ssub.s32 %s23, 2
      %s36 = sadd.s32 1, %s31
      %p37 = scmp.ge.s32.totalorder %s36, 1
      %s38 = scalar_select %p37, 0, %s36
      %s39 = sadd.s32 1, %s30
      %s40 = scalar_select %p37, %s39, %s30
      %p41 = scmp.ge.s32.totalorder %s40, 2
      %s42 = scalar_select %p41, 0, %s40
      %s43 = ssub.s32 %s30, %s42
      %s44 = ssub.s32 %s31, %s38
      %s45 = sor.u32 %s43, %s44
      %p46 = scmp.eq.s32.totalorder %s45, 0
      %s48 = sadd.s32 %s47, 1
      %s49 = scalar_select %p46, %s47, %s48
      %p52 = pneg %p46
      %p53 = scmp.eq.s32.totalorder %s23, 1
      %p54 = por %p52, %p53
      %p55 = scmp.ne.s32.totalorder %s47, %s50
      %p56 = scmp.eq.s32.totalorder %s23, 0
      %p57 = por %p55, %p56
      %p58 = scmp.ne.s32.totalorder %s47, %s50
      %p59 = scmp.eq.s32.totalorder %s28, 1
      %p60 = por %p58, %p59
      %p61 = scmp.ne.s32.totalorder %s50, %s51
      %p62 = scmp.eq.s32.totalorder %s28, 0
      %p63 = por %p61, %p62
      %p64 = scmp.ne.s32.totalorder %s50, %s51
      %p65 = scmp.eq.s32.totalorder %s29, 1
      %p66 = por %p64, %p65
      %p68 = scmp.ne.s32.totalorder %s51, %s67
      %p69 = scmp.eq.s32.totalorder %s29, 0
      %p70 = por %p68, %p69
      %s71 = ssub.s32 %s30, %s42
      %p72 = scmp.eq.s32.totalorder %s71, 0
      %s74 = sadd.s32 %s73, 1
      %s75 = scalar_select %p72, %s73, %s74
      %p78 = pneg %p72
      %p79 = scmp.eq.s32.totalorder %s23, 1
      %p80 = por %p78, %p79
      %p81 = scmp.ne.s32.totalorder %s73, %s76
      %p82 = scmp.eq.s32.totalorder %s23, 0
      %p83 = por %p81, %p82
      %p84 = scmp.ne.s32.totalorder %s73, %s76
      %p85 = scmp.eq.s32.totalorder %s28, 1
      %p86 = por %p84, %p85
      %p87 = scmp.ne.s32.totalorder %s76, %s77
      %p88 = scmp.eq.s32.totalorder %s28, 0
      %p89 = por %p87, %p88
      %p90 = scmp.ne.s32.totalorder %s76, %s77
      %p91 = scmp.eq.s32.totalorder %s29, 1
      %p92 = por %p90, %p91
      %p94 = scmp.ne.s32.totalorder %s77, %s93
      %p95 = scmp.eq.s32.totalorder %s29, 0
      %p96 = por %p94, %p95
      %s97 = ssub.s32 %s30, %s42
      %p98 = scmp.eq.s32.totalorder %s97, 0
      %s100 = sadd.s32 %s99, 1
      %s101 = scalar_select %p98, %s99, %s100
      %p104 = pneg %p98
      %p105 = scmp.eq.s32.totalorder %s23, 1
      %p106 = por %p104, %p105
      %p107 = scmp.ne.s32.totalorder %s99, %s102
      %p108 = scmp.eq.s32.totalorder %s23, 0
      %p109 = por %p107, %p108
      %p110 = scmp.ne.s32.totalorder %s99, %s102
      %p111 = scmp.eq.s32.totalorder %s28, 1
      %p112 = por %p110, %p111
      %p113 = scmp.ne.s32.totalorder %s102, %s103
      %p114 = scmp.eq.s32.totalorder %s28, 0
      %p115 = por %p113, %p114
      %p116 = scmp.ne.s32.totalorder %s102, %s103
      %p117 = scmp.eq.s32.totalorder %s29, 1
      %p118 = por %p116, %p117
      %p120 = scmp.ne.s32.totalorder %s103, %s119
      %p121 = scmp.eq.s32.totalorder %s29, 0
      %p122 = por %p120, %p121
      %s123 = ssub.s32 %s30, %s42
      %s124 = ssub.s32 %s31, %s38
      %s125 = sor.u32 %s123, %s124
      %p126 = scmp.eq.s32.totalorder %s125, 0
      %s128 = sadd.s32 %s127, 1
      %s129 = scalar_select %p126, %s127, %s128
      %p132 = pneg %p126
      %p133 = scmp.eq.s32.totalorder %s23, 1
      %p134 = por %p132, %p133
      %p135 = scmp.ne.s32.totalorder %s127, %s130
      %p136 = scmp.eq.s32.totalorder %s23, 0
      %p137 = por %p135, %p136
      %p138 = scmp.ne.s32.totalorder %s127, %s130
      %p139 = scmp.eq.s32.totalorder %s28, 1
      %p140 = por %p138, %p139
      %p141 = scmp.ne.s32.totalorder %s130, %s131
      %p142 = scmp.eq.s32.totalorder %s28, 0
      %p143 = por %p141, %p142
      %p144 = scmp.ne.s32.totalorder %s130, %s131
      %p145 = scmp.eq.s32.totalorder %s29, 1
      %p146 = por %p144, %p145
      %p148 = scmp.ne.s32.totalorder %s131, %s147
      %p149 = scmp.eq.s32.totalorder %s29, 0
      %p150 = por %p148, %p149
      %s152 = sadd.s32 %s151, 1
      %p155 = scmp.eq.s32.totalorder %s23, 1
      %p156 = scmp.ne.s32.totalorder %s151, %s153
      %p157 = scmp.eq.s32.totalorder %s23, 0
      %p158 = por %p156, %p157
      %p159 = scmp.ne.s32.totalorder %s151, %s153
      %p160 = scmp.eq.s32.totalorder %s28, 1
      %p161 = por %p159, %p160
      %p162 = scmp.ne.s32.totalorder %s153, %s154
      %p163 = scmp.eq.s32.totalorder %s28, 0
      %p164 = por %p162, %p163
      %p165 = scmp.ne.s32.totalorder %s153, %s154
      %p166 = scmp.eq.s32.totalorder %s29, 1
      %p167 = por %p165, %p166
      %p169 = scmp.ne.s32.totalorder %s154, %s168
      %p170 = scmp.eq.s32.totalorder %s29, 0
      %p171 = por %p169, %p170
      %s172 = ssub.s32 %s30, %s42
      %s173 = ssub.s32 %s31, %s38
      %s174 = sor.u32 %s172, %s173
      %p175 = scmp.eq.s32.totalorder %s174, 0
      %s177 = sadd.s32 %s176, 1
      %s178 = scalar_select %p175, %s176, %s177
      %p181 = pneg %p175
      %p182 = scmp.eq.s32.totalorder %s23, 1
      %p183 = por %p181, %p182
      %p184 = scmp.ne.s32.totalorder %s176, %s179
      %p185 = scmp.eq.s32.totalorder %s23, 0
      %p186 = por %p184, %p185
      %p187 = scmp.ne.s32.totalorder %s176, %s179
      %p188 = scmp.eq.s32.totalorder %s28, 1
      %p189 = por %p187, %p188
      %p190 = scmp.ne.s32.totalorder %s179, %s180
      %p191 = scmp.eq.s32.totalorder %s28, 0
      %p192 = por %p190, %p191
      %p193 = scmp.ne.s32.totalorder %s179, %s180
      %p194 = scmp.eq.s32.totalorder %s29, 1
      %p195 = por %p193, %p194
      %p197 = scmp.ne.s32.totalorder %s180, %s196
      %p198 = scmp.eq.s32.totalorder %s29, 0
      %p199 = por %p197, %p198
      %p200 = scmp.le.s32.totalorder 1, %s23
      %p201 = scmp.lt.s32.totalorder %s23, 3
      %p202 = pnand %p200, %p201
      %p203 = pneg %p202
      // Predicated region
      $region9: #{tpu_custom_call.1} parent=5 // pred_check
        _
      $region10: #{tpu_custom_call.1} parent=5 // pred_check_branch
        %205 = sbr.rel (%p202) target = $region12
      $region11: #{tpu_custom_call.1} parent=5 // pred_region
        %s206 = ssub.s32 %s23, 1
        // Predicated region
        $region13: #{tpu_custom_call.1} parent=11 // pred_check
          %p207 = pneg %p164
        $region14: #{tpu_custom_call.1} parent=11 // pred_check_branch
          %209 = sbr.rel (%p207) target = $region16
        $region15: #{tpu_custom_call.1} parent=11 // pred_region
          %s211 = ssub.s32 2048, 2048
          %212 = vsyncadd [#allocation10], %s211
          %s213 = sshll.u32 [#allocation11], 4
          %s214 = int_to_ptr.vmem [resolvable:$true] %s213
          %219 = dma.hbm_to_vmem [thread:$0]  %s4, 2048, %s214, [#allocation10], 128, 128, 8
        $region16: #{tpu_custom_call.1} parent=11 // pred_fallthru
          _
      $region12: #{tpu_custom_call.1} parent=5 // pred_fallthru
        _
      %p220 = scmp.lt.s32.totalorder %s23, 2
      // Predicated region
      $region17: #{tpu_custom_call.1} parent=5 // pred_check
        %p221 = pneg %p220
      $region18: #{tpu_custom_call.1} parent=5 // pred_check_branch
        %223 = sbr.rel (%p221) target = $region20
      $region19: #{tpu_custom_call.1} parent=5 // pred_region
        // Predicated region
        $region21: #{tpu_custom_call.1} parent=19 // pred_check
          %p224 = pneg %p57
        $region22: #{tpu_custom_call.1} parent=19 // pred_check_branch
          %226 = sbr.rel (%p224) target = $region24
        $region23: #{tpu_custom_call.1} parent=19 // pred_region
          %s227 = sand.u32 %s47, 1
          %s228 = scalar_lea.sflag [#allocation4], %s227
          %s229 = sand.u32 %s47, 1
          %s230 = smul.addr %s229, 16
          %s231 = scalar_lea.vmem [#allocation3], %s230
          %s232 = smul.u32 2, %s31
          %s234 = ssub.s32 256, 256
          %235 = vsyncadd %s228, %s234
          %s236 = smul.addr %s30, 2
          %s237 = sadd.s32 %s232, %s236
          %s238 = smul.addr %s237, 128
          %s239 = scalar_lea.hbm %s0, %s238
          %s240 = sshll.u32 %s231, 4
          %s241 = int_to_ptr.vmem [resolvable:$true] %s240
          %246 = dma.hbm_to_vmem [thread:$0]  %s239, 256, %s241, %s228, 128, 128, 8
        $region24: #{tpu_custom_call.1} parent=19 // pred_fallthru
          _
        // Predicated region
        $region25: #{tpu_custom_call.1} parent=19 // pred_check
          %p247 = pneg %p83
        $region26: #{tpu_custom_call.1} parent=19 // pred_check_branch
          %249 = sbr.rel (%p247) target = $region28
        $region27: #{tpu_custom_call.1} parent=19 // pred_region
          %s250 = sand.u32 %s23, 1
          %s251 = scalar_lea.sflag [#allocation7], %s250
          %s252 = sand.u32 %s73, 1
          %s253 = smul.addr %s252, 16
          %s254 = scalar_lea.vmem [#allocation6], %s253
          %s256 = ssub.s32 256, 256
          %257 = vsyncadd %s251, %s256
          %s258 = smul.addr %s30, 2
          %s259 = smul.addr %s258, 128
          %s260 = scalar_lea.hbm %s1, %s259
          %s261 = sshll.u32 %s254, 4
          %s262 = int_to_ptr.vmem [resolvable:$true] %s261
          %267 = dma.hbm_to_vmem [thread:$0]  %s260, 256, %s262, %s251, 128, 128, 8
        $region28: #{tpu_custom_call.1} parent=19 // pred_fallthru
          _
        // Predicated region
        $region29: #{tpu_custom_call.1} parent=19 // pred_check
          %p268 = pneg %p109
        $region30: #{tpu_custom_call.1} parent=19 // pred_check_branch
          %270 = sbr.rel (%p268) target = $region32
        $region31: #{tpu_custom_call.1} parent=19 // pred_region
          %s271 = sand.u32 %s23, 1
          %s272 = scalar_lea.sflag [#allocation7], %s271
          %s273 = sand.u32 %s99, 1
          %s274 = smul.addr %s273, 16
          %s275 = scalar_lea.vmem [#allocation8], %s274
          %s277 = ssub.s32 256, 256
          %278 = vsyncadd %s272, %s277
          %s279 = smul.addr %s30, 2
          %s280 = smul.addr %s279, 128
          %s281 = scalar_lea.hbm %s2, %s280
          %s282 = sshll.u32 %s275, 4
          %s283 = int_to_ptr.vmem [resolvable:$true] %s282
          %288 = dma.hbm_to_vmem [thread:$0]  %s281, 256, %s283, %s272, 128, 128, 8
        $region32: #{tpu_custom_call.1} parent=19 // pred_fallthru
          _
        // Predicated region
        $region33: #{tpu_custom_call.1} parent=19 // pred_check
          %p289 = pneg %p137
        $region34: #{tpu_custom_call.1} parent=19 // pred_check_branch
          %291 = sbr.rel (%p289) target = $region36
        $region35: #{tpu_custom_call.1} parent=19 // pred_region
          %s292 = sand.u32 %s23, 1
          %s293 = scalar_lea.sflag [#allocation10], %s292
          %s294 = sand.u32 %s127, 1
          %s295 = smul.addr %s294, 16
          %s296 = scalar_lea.vmem [#allocation9], %s295
          %s297 = smul.u32 2, %s31
          %s299 = ssub.s32 256, 256
          %300 = vsyncadd %s293, %s299
          %s301 = smul.addr %s30, 2
          %s302 = sadd.s32 %s297, %s301
          %s303 = smul.addr %s302, 128
          %s304 = scalar_lea.hbm %s3, %s303
          %s305 = sshll.u32 %s296, 4
          %s306 = int_to_ptr.vmem [resolvable:$true] %s305
          %311 = dma.hbm_to_vmem [thread:$0]  %s304, 256, %s306, %s293, 128, 128, 8
        $region36: #{tpu_custom_call.1} parent=19 // pred_fallthru
          _
      $region20: #{tpu_custom_call.1} parent=5 // pred_fallthru
        _
      %p312 = scmp.le.s32.totalorder 1, %s23
      %p313 = scmp.lt.s32.totalorder %s23, 3
      %p314 = pnand %p312, %p313
      %p315 = pneg %p314
      // Predicated region
      $region37: #{tpu_custom_call.1} parent=5 // pred_check
        _
      $region38: #{tpu_custom_call.1} parent=5 // pred_check_branch
        %317 = sbr.rel (%p314) target = $region40
      $region39: #{tpu_custom_call.1} parent=5 // pred_region
        %s318 = ssub.s32 %s23, 1
        %s319 = sand.u32 %s50, 1
        %s320 = scalar_lea.sflag [#allocation4], %s319
        %s321 = sand.u32 %s50, 1
        %s322 = smul.addr %s321, 16
        %s323 = scalar_lea.vmem [#allocation3], %s322
        // Predicated region
        $region41: #{tpu_custom_call.1} parent=39 // pred_check
          %p324 = pneg %p63
        $region42: #{tpu_custom_call.1} parent=39 // pred_check_branch
          %326 = sbr.rel (%p324) target = $region44
        $region43: #{tpu_custom_call.1} parent=39 // pred_region
          %327 = dma.done %s320, 256
        $region44: #{tpu_custom_call.1} parent=39 // pred_fallthru
          _
        %s328 = sand.u32 %s28, 1
        %s329 = scalar_lea.sflag [#allocation7], %s328
        %s330 = sand.u32 %s76, 1
        %s331 = smul.addr %s330, 16
        %s332 = scalar_lea.vmem [#allocation6], %s331
        // Predicated region
        $region45: #{tpu_custom_call.1} parent=39 // pred_check
          %p333 = pneg %p89
        $region46: #{tpu_custom_call.1} parent=39 // pred_check_branch
          %335 = sbr.rel (%p333) target = $region48
        $region47: #{tpu_custom_call.1} parent=39 // pred_region
          %336 = dma.done %s329, 256
        $region48: #{tpu_custom_call.1} parent=39 // pred_fallthru
          _
        %s337 = sand.u32 %s28, 1
        %s338 = scalar_lea.sflag [#allocation7], %s337
        %s339 = sand.u32 %s102, 1
        %s340 = smul.addr %s339, 16
        %s341 = scalar_lea.vmem [#allocation8], %s340
        // Predicated region
        $region49: #{tpu_custom_call.1} parent=39 // pred_check
          %p342 = pneg %p115
        $region50: #{tpu_custom_call.1} parent=39 // pred_check_branch
          %344 = sbr.rel (%p342) target = $region52
        $region51: #{tpu_custom_call.1} parent=39 // pred_region
          %345 = dma.done %s338, 256
        $region52: #{tpu_custom_call.1} parent=39 // pred_fallthru
          _
        %s346 = sand.u32 %s28, 1
        %s347 = scalar_lea.sflag [#allocation10], %s346
        %s348 = sand.u32 %s130, 1
        %s349 = smul.addr %s348, 16
        %s350 = scalar_lea.vmem [#allocation9], %s349
        // Predicated region
        $region53: #{tpu_custom_call.1} parent=39 // pred_check
          %p351 = pneg %p143
        $region54: #{tpu_custom_call.1} parent=39 // pred_check_branch
          %353 = sbr.rel (%p351) target = $region56
        $region55: #{tpu_custom_call.1} parent=39 // pred_region
          %354 = dma.done %s347, 256
        $region56: #{tpu_custom_call.1} parent=39 // pred_fallthru
          _
        // Predicated region
        $region57: #{tpu_custom_call.1} parent=39 // pred_check
          %p355 = pneg %p164
        $region58: #{tpu_custom_call.1} parent=39 // pred_check_branch
          %357 = sbr.rel (%p355) target = $region60
        $region59: #{tpu_custom_call.1} parent=39 // pred_region
          %358 = dma.done [#allocation10], 2048
        $region60: #{tpu_custom_call.1} parent=39 // pred_fallthru
          _
        %s359 = sand.u32 %s50, 1
        %s360 = scalar_lea.sflag [#allocation4], %s359
        %s361 = sand.u32 %s50, 1
        %s362 = smul.addr %s361, 16
        %s363 = scalar_lea.vmem [#allocation3], %s362
        %p364 = pneg %p63
        %p365 = pneg %p60
        %s366 = sand.u32 %s28, 1
        %s367 = scalar_lea.sflag [#allocation7], %s366
        %s368 = sand.u32 %s76, 1
        %s369 = smul.addr %s368, 16
        %s370 = scalar_lea.vmem [#allocation6], %s369
        %p371 = pneg %p89
        %p372 = pneg %p86
        %s373 = sand.u32 %s28, 1
        %s374 = scalar_lea.sflag [#allocation7], %s373
        %s375 = sand.u32 %s102, 1
        %s376 = smul.addr %s375, 16
        %s377 = scalar_lea.vmem [#allocation8], %s376
        %p378 = pneg %p115
        %p379 = pneg %p112
        %s380 = sand.u32 %s28, 1
        %s381 = scalar_lea.sflag [#allocation10], %s380
        %s382 = sand.u32 %s130, 1
        %s383 = smul.addr %s382, 16
        %s384 = scalar_lea.vmem [#allocation9], %s383
        %p385 = pneg %p143
        %p386 = pneg %p140
        %p387 = pneg %p164
        %p388 = pneg %p161
        %p389 = pneg %p192
        %p390 = pneg %p189
        %s391 = sand.u32 %s179, 1
        %s392 = scalar_lea.sflag [#allocation5], %s391
        %s393 = sand.u32 %s179, 1
        %s394 = smul.addr %s393, 16
        %s395 = scalar_lea.vmem [#allocation12], %s394
        %s396 = smul.u32 2, %s33
        %s397 = smul.u32 2, %s33
        %s398 = smul.u32 2, %s33
        %p399 = scmp.eq.s32.totalorder %s33, 0
        // Predicated region
        $region61: #{tpu_custom_call.1} parent=39 // pred_check
          %p400 = pneg %p399
        $region62: #{tpu_custom_call.1} parent=39 // pred_check_branch
          %402 = sbr.rel (%p400) target = $region64
        $region63: #{tpu_custom_call.1} parent=39 // pred_region
          %v403 = vld [vmem:[%s332] sm:$0xff]
          %v404 = vld [vmem:[%s332 + $0x8] sm:$0xff]
          %v405 = vld [vmem:[#allocation11] sm:$0xff]
          %v406 = vld [vmem:[#allocation11 + $0x8] sm:$0xff]
          %v407 = vld [vmem:[#allocation11 + $0x10] sm:$0xff]
          %v408 = vld [vmem:[#allocation11 + $0x18] sm:$0xff]
          %v409 = vld [vmem:[#allocation11 + $0x20] sm:$0xff]
          %v410 = vld [vmem:[#allocation11 + $0x28] sm:$0xff]
          %v411 = vld [vmem:[#allocation11 + $0x30] sm:$0xff]
          %v412 = vld [vmem:[#allocation11 + $0x38] sm:$0xff]
          %v413 = vld [vmem:[#allocation11 + $0x40] sm:$0xff]
          %v414 = vld [vmem:[#allocation11 + $0x48] sm:$0xff]
          %v415 = vld [vmem:[#allocation11 + $0x50] sm:$0xff]
          %v416 = vld [vmem:[#allocation11 + $0x58] sm:$0xff]
          %v417 = vld [vmem:[#allocation11 + $0x60] sm:$0xff]
          %v418 = vld [vmem:[#allocation11 + $0x68] sm:$0xff]
          %v419 = vld [vmem:[#allocation11 + $0x70] sm:$0xff]
          %v420 = vld [vmem:[#allocation11 + $0x78] sm:$0xff]
          %421 = vmatprep.subr.mxu0 0.0
          %422 = vmatpush1.msra.mxu0 %v405
          %423 = vmatprep.subr.mxu0 0.0
          %424 = vmatpush1.msra.mxu0 %v406
          %425 = vmatprep.subr.mxu0 0.0
          %426 = vmatpush1.msra.mxu0 %v407
          %427 = vmatprep.subr.mxu0 0.0
          %428 = vmatpush1.msra.mxu0 %v408
          %429 = vmatprep.subr.mxu0 0.0
          %430 = vmatpush1.msra.mxu0 %v409
          %431 = vmatprep.subr.mxu0 0.0
          %432 = vmatpush1.msra.mxu0 %v410
          %433 = vmatprep.subr.mxu0 0.0
          %434 = vmatpush1.msra.mxu0 %v411
          %435 = vmatprep.subr.mxu0 0.0
          %436 = vmatpush1.msra.mxu0 %v412
          %437 = vmatprep.subr.mxu0 0.0
          %438 = vmatpush1.msra.mxu0 %v413
          %439 = vmatprep.subr.mxu0 0.0
          %440 = vmatpush1.msra.mxu0 %v414
          %441 = vmatprep.subr.mxu0 0.0
          %442 = vmatpush1.msra.mxu0 %v415
          %443 = vmatprep.subr.mxu0 0.0
          %444 = vmatpush1.msra.mxu0 %v416
          %445 = vmatprep.subr.mxu0 0.0
          %446 = vmatpush1.msra.mxu0 %v417
          %447 = vmatprep.subr.mxu0 0.0
          %448 = vmatpush1.msra.mxu0 %v418
          %449 = vmatprep.subr.mxu0 0.0
          %450 = vmatpush1.msra.mxu0 %v419
          %451 = vmatprep.subr.mxu0 0.0
          %452 = vmatpush1.msra.mxu0 %v420
          %453 = vmatprep.subr.mxu0 0.0
          %454 = vmatpush1.msra.mxu0 0.0
          %455 = vmatprep.subr.mxu0 0.0
          %456 = vmatpush1.msra.mxu0 0.0
          %457 = vmatprep.subr.mxu0 0.0
          %458 = vmatpush1.msra.mxu0 0.0
          %459 = vmatprep.subr.mxu0 0.0
          %460 = vmatpush1.msra.mxu0 0.0
          %461 = vmatprep.subr.mxu0 0.0
          %462 = vmatpush1.msra.mxu0 0.0
          %463 = vmatprep.subr.mxu0 0.0
          %464 = vmatpush1.msra.mxu0 0.0
          %465 = vmatprep.subr.mxu0 0.0
          %466 = vmatpush1.msra.mxu0 0.0
          %467 = vmatprep.subr.mxu0 0.0
          %468 = vmatpush1.msra.mxu0 0.0
          %469 = vmatprep.subr.mxu0 0.0
          %470 = vmatpush1.msra.mxu0 0.0
          %471 = vmatprep.subr.mxu0 0.0
          %472 = vmatpush1.msra.mxu0 0.0
          %473 = vmatprep.subr.mxu0 0.0
          %474 = vmatpush1.msra.mxu0 0.0
          %475 = vmatprep.subr.mxu0 0.0
          %476 = vmatpush1.msra.mxu0 0.0
          %477 = vmatprep.subr.mxu0 0.0
          %478 = vmatpush1.msra.mxu0 0.0
          %479 = vmatprep.subr.mxu0 0.0
          %480 = vmatpush1.msra.mxu0 0.0
          %481 = vmatprep.subr.mxu0 0.0
          %482 = vmatpush1.msra.mxu0 0.0
          %483 = vmatprep.subr.mxu0 0.0
          %484 = vmatpush1.msra.mxu0 0.0
          %485 = vmatprep.mubr.f32.mxu0 0.0
          %486 = vmatmul.mubr.f32.gmra.mrb[0].mxu0 %v403
          %v487 = vpop.f32.mrb[0].mxu0
          %v488 = vadd.f32 0.0, %v487
          %v489 = vpop.f32.mrb[0].mxu0
          %490 = vmatprep.mubr.f32.mxu0 0.0
          %491 = vmatmul.mubr.f32.gmra.mrb[0].mxu0 %v404
          %v492 = vpop.f32.mrb[0].mxu0
          %v493 = vadd.f32 0.0, %v492
          %v494 = vpop.f32.mrb[0].mxu0
          %495 = vdwg.mxu0
          %v496 = vmul.f32 %v488, 0.25
          %v497 = vmul.f32 %v493, 0.25
          %498 = vst [vmem:[#allocation2] sm:$0xff] %v496
          %499 = vst [vmem:[#allocation2 + $0x8] sm:$0xff] %v497
        $region64: #{tpu_custom_call.1} parent=39 // pred_fallthru
          _
        %v500 = vld [vmem:[%s323] sm:$0xff]
        %v501 = vld [vmem:[%s323 + $0x8] sm:$0xff]
        %v502 = vld [vmem:[#allocation2] sm:$0xff]
        %v503 = vld [vmem:[#allocation2 + $0x8] sm:$0xff]
        %504 = vmatprep.subr.mxu0 0.0
        %505 = vmatpush1.xpose.msra.mxu0 %v502
        %506 = vmatprep.subr.mxu0 0.0
        %507 = vmatpush1.xpose.msra.mxu0 %v503
        %508 = vmatprep.subr.mxu0 0.0
        %509 = vmatpush1.xpose.msra.mxu0 0.0
        %510 = vmatprep.subr.mxu0 0.0
        %511 = vmatpush1.xpose.msra.mxu0 0.0
        %512 = vmatprep.subr.mxu0 0.0
        %513 = vmatpush1.xpose.msra.mxu0 0.0
        %514 = vmatprep.subr.mxu0 0.0
        %515 = vmatpush1.xpose.msra.mxu0 0.0
        %516 = vmatprep.subr.mxu0 0.0
        %517 = vmatpush1.xpose.msra.mxu0 0.0
        %518 = vmatprep.subr.mxu0 0.0
        %519 = vmatpush1.xpose.msra.mxu0 0.0
        %520 = vmatprep.subr.mxu0 0.0
        %521 = vmatpush1.xpose.msra.mxu0 0.0
        %522 = vmatprep.subr.mxu0 0.0
        %523 = vmatpush1.xpose.msra.mxu0 0.0
        %524 = vmatprep.subr.mxu0 0.0
        %525 = vmatpush1.xpose.msra.mxu0 0.0
        %526 = vmatprep.subr.mxu0 0.0
        %527 = vmatpush1.xpose.msra.mxu0 0.0
        %528 = vmatprep.subr.mxu0 0.0
        %529 = vmatpush1.xpose.msra.mxu0 0.0
        %530 = vmatprep.subr.mxu0 0.0
        %531 = vmatpush1.xpose.msra.mxu0 0.0
        %532 = vmatprep.subr.mxu0 0.0
        %533 = vmatpush1.xpose.msra.mxu0 0.0
        %534 = vmatprep.subr.mxu0 0.0
        %535 = vmatpush1.xpose.msra.mxu0 0.0
        %536 = vmatprep.subr.mxu0 0.0
        %537 = vmatpush1.xpose.msra.mxu0 0.0
        %538 = vmatprep.subr.mxu0 0.0
        %539 = vmatpush1.xpose.msra.mxu0 0.0
        %540 = vmatprep.subr.mxu0 0.0
        %541 = vmatpush1.xpose.msra.mxu0 0.0
        %542 = vmatprep.subr.mxu0 0.0
        %543 = vmatpush1.xpose.msra.mxu0 0.0
        %544 = vmatprep.subr.mxu0 0.0
        %545 = vmatpush1.xpose.msra.mxu0 0.0
        %546 = vmatprep.subr.mxu0 0.0
        %547 = vmatpush1.xpose.msra.mxu0 0.0
        %548 = vmatprep.subr.mxu0 0.0
        %549 = vmatpush1.xpose.msra.mxu0 0.0
        %550 = vmatprep.subr.mxu0 0.0
        %551 = vmatpush1.xpose.msra.mxu0 0.0
        %552 = vmatprep.subr.mxu0 0.0
        %553 = vmatpush1.xpose.msra.mxu0 0.0
        %554 = vmatprep.subr.mxu0 0.0
        %555 = vmatpush1.xpose.msra.mxu0 0.0
        %556 = vmatprep.subr.mxu0 0.0
        %557 = vmatpush1.xpose.msra.mxu0 0.0
        %558 = vmatprep.subr.mxu0 0.0
        %559 = vmatpush1.xpose.msra.mxu0 0.0
        %560 = vmatprep.subr.mxu0 0.0
        %561 = vmatpush1.xpose.msra.mxu0 0.0
        %562 = vmatprep.subr.mxu0 0.0
        %563 = vmatpush1.xpose.msra.mxu0 0.0
        %564 = vmatprep.subr.mxu0 0.0
        %565 = vmatpush1.xpose.msra.mxu0 0.0
        %566 = vmatprep.subr.mxu0 0.0
        %567 = vmatpush1.xpose.msra.mxu0 0.0
        %568 = vmatprep.mubr.f32.mxu0 0.0
        %569 = vmatmul.mubr.f32.gmra.mrb[0].mxu0 %v500
        %v570 = vpop.f32.mrb[0].mxu0
        %v571 = vadd.f32 0.0, %v570
        %v572 = vpop.f32.mrb[0].mxu0
        %573 = vmatprep.mubr.f32.mxu0 0.0
        %574 = vmatmul.mubr.f32.gmra.mrb[0].mxu0 %v501
        %v575 = vpop.f32.mrb[0].mxu0
        %v576 = vadd.f32 0.0, %v575
        %v577 = vpop.f32.mrb[0].mxu0
        %578 = vdwg.mxu0
        %v579 = vld [vmem:[%s350] sm:$0xff]
        %v580 = vld [vmem:[%s350 + $0x8] sm:$0xff]
        %vm581 = vcmp.ne.f32.partialorder %v579, 0.0
        %vm582 = vcmp.ne.f32.partialorder %v580, 0.0
        %v583 = vsel %vm581, %v571, -1e+30
        %v584 = vsel %vm582, %v576, -1e+30
        %vm585 = vcmask 130048
        %v586 = vsel %vm585, %v583, -inf
        %587 = vmax.xlane.f32.xlu0 %v586
        %v588 = vpop.xlane.xlu0 %587
        %v589 = vsel %vm585, %v584, -inf
        %590 = vmax.xlane.f32.xlu0 %v589
        %v591 = vpop.xlane.xlu0 %590
        %v592 = vsub.f32 %v583, %v588
        %v593 = vsub.f32 %v584, %v591
        %v594 = vmul.f32 %v592, 1.442695
        %v595 = vpow.pop %v594
        %v596 = vmul.f32 %v593, 1.442695
        %v597 = vpow.pop %v596
        %v598 = vsel %vm585, %v595, 0.0
        %599 = vadd.xlane.f32.xlu0 %v598
        %v600 = vpop.xlane.xlu0 %599
        %v601 = vsel %vm585, %v597, 0.0
        %602 = vadd.xlane.f32.xlu0 %v601
        %v603 = vpop.xlane.xlu0 %602
        %v604 = vld [vmem:[%s341] sm:$0xff]
        %v605 = vld [vmem:[%s341 + $0x8] sm:$0xff]
        %v607 = vsel %vm585, %v595, 0
        %v610 = vsel %vm585, %v597, 0
        %612 = vmatprep.subr.mxu0 0.0
        %613 = vmatpush1.msra.mxu0 %v604
        %614 = vmatprep.subr.mxu0 0.0
        %615 = vmatpush1.msra.mxu0 %v605
        %616 = vmatprep.subr.mxu0 0.0
        %617 = vmatpush1.msra.mxu0 0.0
        %618 = vmatprep.subr.mxu0 0.0
        %619 = vmatpush1.msra.mxu0 0.0
        %620 = vmatprep.subr.mxu0 0.0
        %621 = vmatpush1.msra.mxu0 0.0
        %622 = vmatprep.subr.mxu0 0.0
        %623 = vmatpush1.msra.mxu0 0.0
        %624 = vmatprep.subr.mxu0 0.0
        %625 = vmatpush1.msra.mxu0 0.0
        %626 = vmatprep.subr.mxu0 0.0
        %627 = vmatpush1.msra.mxu0 0.0
        %628 = vmatprep.subr.mxu0 0.0
        %629 = vmatpush1.msra.mxu0 0.0
        %630 = vmatprep.subr.mxu0 0.0
        %631 = vmatpush1.msra.mxu0 0.0
        %632 = vmatprep.subr.mxu0 0.0
        %633 = vmatpush1.msra.mxu0 0.0
        %634 = vmatprep.subr.mxu0 0.0
        %635 = vmatpush1.msra.mxu0 0.0
        %636 = vmatprep.subr.mxu0 0.0
        %637 = vmatpush1.msra.mxu0 0.0
        %638 = vmatprep.subr.mxu0 0.0
        %639 = vmatpush1.msra.mxu0 0.0
        %640 = vmatprep.subr.mxu0 0.0
        %641 = vmatpush1.msra.mxu0 0.0
        %642 = vmatprep.subr.mxu0 0.0
        %643 = vmatpush1.msra.mxu0 0.0
        %644 = vmatprep.subr.mxu0 0.0
        %645 = vmatpush1.msra.mxu0 0.0
        %646 = vmatprep.subr.mxu0 0.0
        %647 = vmatpush1.msra.mxu0 0.0
        %648 = vmatprep.subr.mxu0 0.0
        %649 = vmatpush1.msra.mxu0 0.0
        %650 = vmatprep.subr.mxu0 0.0
        %651 = vmatpush1.msra.mxu0 0.0
        %652 = vmatprep.subr.mxu0 0.0
        %653 = vmatpush1.msra.mxu0 0.0
        %654 = vmatprep.subr.mxu0 0.0
        %655 = vmatpush1.msra.mxu0 0.0
        %656 = vmatprep.subr.mxu0 0.0
        %657 = vmatpush1.msra.mxu0 0.0
        %658 = vmatprep.subr.mxu0 0.0
        %659 = vmatpush1.msra.mxu0 0.0
        %660 = vmatprep.subr.mxu0 0.0
        %661 = vmatpush1.msra.mxu0 0.0
        %662 = vmatprep.subr.mxu0 0.0
        %663 = vmatpush1.msra.mxu0 0.0
        %664 = vmatprep.subr.mxu0 0.0
        %665 = vmatpush1.msra.mxu0 0.0
        %666 = vmatprep.subr.mxu0 0.0
        %667 = vmatpush1.msra.mxu0 0.0
        %668 = vmatprep.subr.mxu0 0.0
        %669 = vmatpush1.msra.mxu0 0.0
        %670 = vmatprep.subr.mxu0 0.0
        %671 = vmatpush1.msra.mxu0 0.0
        %672 = vmatprep.subr.mxu0 0.0
        %673 = vmatpush1.msra.mxu0 0.0
        %674 = vmatprep.subr.mxu0 0.0
        %675 = vmatpush1.msra.mxu0 0.0
        %676 = vmatprep.mubr.f32.mxu0 0.0
        %677 = vmatmul.mubr.f32.gmra.mrb[0].mxu0 %v607
        %v678 = vpop.f32.mrb[0].mxu0
        %v679 = vadd.f32 0.0, %v678
        %v680 = vpop.f32.mrb[0].mxu0
        %681 = vmatprep.mubr.f32.mxu0 0.0
        %682 = vmatmul.mubr.f32.gmra.mrb[0].mxu0 %v610
        %v683 = vpop.f32.mrb[0].mxu0
        %v684 = vadd.f32 0.0, %v683
        %v685 = vpop.f32.mrb[0].mxu0
        %686 = vdwg.mxu0
        %v687 = vrcp.pop %v600
        %v688 = vrcp.pop %v603
        %v689 = vmul.f32 %v600, %v687
        %v690 = vmul.f32 %v603, %v688
        %v691 = vsub.f32 2.0, %v689
        %v692 = vsub.f32 2.0, %v690
        %v693 = vmul.f32 %v687, %v691
        %v694 = vmul.f32 %v688, %v692
        %v695 = vsel %vm581, 1, 0
        %v696 = vsel %vm582, 1, 0
        %v697 = vcvt.s32.f32 %v695
        %v698 = vcvt.s32.f32 %v696
        %v699 = vsel %vm585, %v697, -inf
        %700 = vmax.xlane.f32.xlu0 %v699
        %v701 = vpop.xlane.xlu0 %700
        %v702 = vsel %vm585, %v698, -inf
        %703 = vmax.xlane.f32.xlu0 %v702
        %v704 = vpop.xlane.xlu0 %703
        %v705 = vmul.f32 %v693, %v701
        %v706 = vmul.f32 %v694, %v704
        %v707 = vmul.f32 %v679, %v705
        %v708 = vmul.f32 %v684, %v706
        %709 = vst [vmem:[%s395] sm:$0xff] %v707
        %710 = vst [vmem:[%s395 + $0x8] sm:$0xff] %v708
        %s711 = sand.u32 %s179, 1
        %s712 = scalar_lea.sflag [#allocation5], %s711
        %s713 = sand.u32 %s179, 1
        %s714 = smul.addr %s713, 16
        %s715 = scalar_lea.vmem [#allocation12], %s714
        // Predicated region
        $region65: #{tpu_custom_call.1} parent=39 // pred_check
          %p716 = pneg %p189
        $region66: #{tpu_custom_call.1} parent=39 // pred_check_branch
          %718 = sbr.rel (%p716) target = $region68
        $region67: #{tpu_custom_call.1} parent=39 // pred_region
          %s719 = smul.u32 2, %s33
          %s721 = ssub.s32 256, 256
          %722 = vsyncadd %s712, %s721
          %s723 = smul.addr %s32, 2
          %s724 = sadd.s32 %s719, %s723
          %s725 = smul.addr %s724, 128
          %s726 = scalar_lea.hbm %s5, %s725
          %s727 = sshll.u32 %s715, 4
          %s728 = int_to_ptr.vmem [resolvable:$true] %s727
          %733 = dma.vmem_to_hbm [thread:$0]  %s728, 256, %s726, %s712, 128, 128, 8
        $region68: #{tpu_custom_call.1} parent=39 // pred_fallthru
          _
      $region40: #{tpu_custom_call.1} parent=5 // pred_fallthru
        _
      %p734 = scmp.le.s32.totalorder 2, %s23
      // Predicated region
      $region69: #{tpu_custom_call.1} parent=5 // pred_check
        %p735 = pneg %p734
      $region70: #{tpu_custom_call.1} parent=5 // pred_check_branch
        %737 = sbr.rel (%p735) target = $region72
      $region71: #{tpu_custom_call.1} parent=5 // pred_region
        %s738 = ssub.s32 %s23, 2
        // Predicated region
        $region73: #{tpu_custom_call.1} parent=71 // pred_check
          %p739 = pneg %p195
        $region74: #{tpu_custom_call.1} parent=71 // pred_check_branch
          %741 = sbr.rel (%p739) target = $region76
        $region75: #{tpu_custom_call.1} parent=71 // pred_region
          %s742 = sand.u32 %s180, 1
          %s743 = scalar_lea.sflag [#allocation5], %s742
          %s744 = sand.u32 %s180, 1
          %s745 = smul.addr %s744, 16
          %s746 = scalar_lea.vmem [#allocation12], %s745
          %747 = dma.done %s743, 256
        $region76: #{tpu_custom_call.1} parent=71 // pred_fallthru
          _
      $region72: #{tpu_custom_call.1} parent=5 // pred_fallthru
        _
    $region6: #{tpu_custom_call.1} parent=1 // loop_footer
      %s27 = sadd.s32 1, %s23
    $region7: #{tpu_custom_call.1} parent=1 // loop_footer_branch
      %22 = sbr.rel target = $region3
    $region8: #{tpu_custom_call.1} parent=1 // loop_exit
      _
    %748 = vsyncpa [#allocation4], 1
    %s749 = scalar_lea.sflag [#allocation4], 1
    %750 = vsyncpa %s749, 1
    %751 = vsyncpa [#allocation7], 1
    %s752 = scalar_lea.sflag [#allocation7], 1
    %753 = vsyncpa %s752, 1
    %754 = vsyncpa [#allocation10], 1
    %s755 = scalar_lea.sflag [#allocation10], 1
    %756 = vsyncpa %s755, 1
    %757 = vsyncpa [#allocation5], 1
    %s758 = scalar_lea.sflag [#allocation5], 1
    %759 = vsyncpa %s758, 1

</llo_original>
